<compile_context>
chip_gen: v7x
topology: tpu7x:2x2x1
jax: 0.10.0
libtpu: 0.0.40
codegen_flags: <defaults>
</compile_context>

<pallas_src>
import jax
import jax.numpy as jnp
from jax.experimental import pallas as pl
from jax.experimental.pallas import tpu as pltpu

EMBED_DIM = 100               # embedding_dim in the PyTorch script
HIDDEN_DIM = 4 * EMBED_DIM    # 400
# dropout = 0 in the PyTorch module -> identity, so it is omitted here.


def _round_up(a, b):
    return (a + b - 1) // b * b


def _ffn_kernel(x_ref, w1_ref, b1_ref, w2_ref, b2_ref, o_ref):
    """Fused Linear -> ReLU -> Linear on one (tm, Cp) row tile.

    x_ref : (tm, Cp)   padded input rows
    w1_ref: (Cp, Hp)   first Linear weight (transposed, zero-padded)
    b1_ref: (1, Hp)    first Linear bias (zero-padded)
    w2_ref: (Hp, Cp)   second Linear weight (transposed, zero-padded)
    b2_ref: (1, Cp)    second Linear bias (zero-padded)
    o_ref : (tm, Cp)   padded output rows
    """
    x = x_ref[...]
    h = jnp.dot(x, w1_ref[...], preferred_element_type=jnp.float32) + b1_ref[...]
    h = jnp.maximum(h, 0.0)                                            # ReLU
    out = jnp.dot(h, w2_ref[...], preferred_element_type=jnp.float32) + b2_ref[...]
    o_ref[...] = out.astype(o_ref.dtype)


@jax.jit
def feed_forward(x, w1, b1, w2, b2):
    """x: (..., C).  w1: (C, H), b1: (H,), w2: (H, C), b2: (C,)."""
    orig_shape = x.shape
    C = orig_shape[-1]
    H = w1.shape[1]
    M = 1
    for d in orig_shape[:-1]:
        M *= d

    # ---- lane-dense padding: last dims -> multiples of 128 -----------------
    Cp = _round_up(C, 128)
    Hp = _round_up(H, 128)

    # ---- row blocking: tm rows per grid step, >=2 steps when possible ------
    M8 = _round_up(M, 8)
    tm = min(256, M8)
    if M8 // tm < 2 and M8 >= 16:      # give v7x's second TensorCore work
        tm = _round_up(pl.cdiv(M8, 2), 8)
    Mp = _round_up(M, tm)

    xp = jnp.zeros((Mp, Cp), x.dtype).at[:M, :C].set(x.reshape(M, C))
    w1p = jnp.zeros((Cp, Hp), w1.dtype).at[:C, :H].set(w1)
    b1p = jnp.zeros((1, Hp), b1.dtype).at[0, :H].set(b1)
    w2p = jnp.zeros((Hp, Cp), w2.dtype).at[:H, :C].set(w2)
    b2p = jnp.zeros((1, Cp), b2.dtype).at[0, :C].set(b2)

    out_p = pl.pallas_call(
        _ffn_kernel,
        out_shape=jax.ShapeDtypeStruct((Mp, Cp), x.dtype),
        grid_spec=pltpu.PrefetchScalarGridSpec(
            num_scalar_prefetch=0,
            grid=(Mp // tm,),
            in_specs=[
                pl.BlockSpec((tm, Cp), lambda i: (i, 0)),   # x rows
                pl.BlockSpec((Cp, Hp), lambda i: (0, 0)),   # w1 (constant block)
                pl.BlockSpec((1, Hp), lambda i: (0, 0)),    # b1
                pl.BlockSpec((Hp, Cp), lambda i: (0, 0)),   # w2
                pl.BlockSpec((1, Cp), lambda i: (0, 0)),    # b2
            ],
            out_specs=pl.BlockSpec((tm, Cp), lambda i: (i, 0)),
        ),
        compiler_params=pltpu.CompilerParams(
            dimension_semantics=("parallel",)),
    )(xp, w1p, b1p, w2p, b2p)

    return out_p[:M, :C].reshape(orig_shape)


def _reference(x, w1, b1, w2, b2):
    """Pure-JAX reference matching the PyTorch forward exactly (dropout=0)."""
    h = jnp.maximum(x @ w1 + b1, 0.0)
    return h @ w2 + b2


def _init_params(key):
    """PyTorch-Linear-style init: uniform(-1/sqrt(fan_in), 1/sqrt(fan_in))."""
    k1, k2, k3, k4 = jax.random.split(key, 4)
    bound1 = 1.0 / (EMBED_DIM ** 0.5)    # fan_in of Linear(C, 4C)
    bound2 = 1.0 / (HIDDEN_DIM ** 0.5)   # fan_in of Linear(4C, C)
    # weights stored already transposed: (in_features, out_features)
    w1 = jax.random.uniform(k1, (EMBED_DIM, HIDDEN_DIM), jnp.float32, -bound1, bound1)
    b1 = jax.random.uniform(k2, (HIDDEN_DIM,), jnp.float32, -bound1, bound1)
    w2 = jax.random.uniform(k3, (HIDDEN_DIM, EMBED_DIM), jnp.float32, -bound2, bound2)
    b2 = jax.random.uniform(k4, (EMBED_DIM,), jnp.float32, -bound2, bound2)
    return w1, b1, w2, b2


if __name__ == "__main__":
    key = jax.random.PRNGKey(0)
    k_x, k_p = jax.random.split(key)

    B, T = 2, 8                                   # small shapes, (B, T, C) like simple_gpt
    x = jax.random.normal(k_x, (B, T, EMBED_DIM), dtype=jnp.float32)
    w1, b1, w2, b2 = _init_params(k_p)

    out = feed_forward(x, w1, b1, w2, b2)
    out = jax.block_until_ready(out)

    ref = _reference(x, w1, b1, w2, b2)
    assert out.shape == (B, T, EMBED_DIM)
    assert jnp.allclose(out, ref, atol=1e-4, rtol=1e-4), "mismatch vs reference"

    print("KERNEL_OK")
</pallas_src>

<mosaic_0001>
module attributes {stable_mosaic.version = 11 : i64} {
  func.func @_ffn_kernel(%arg0: i32, %arg1: memref<8x128xf32, #tpu.memory_space<vmem>>, %arg2: memref<128x512xf32, #tpu.memory_space<vmem>>, %arg3: memref<1x512xf32, #tpu.memory_space<vmem>>, %arg4: memref<512x128xf32, #tpu.memory_space<vmem>>, %arg5: memref<1x128xf32, #tpu.memory_space<vmem>>, %arg6: memref<8x128xf32, #tpu.memory_space<vmem>>) attributes {dimension_semantics = [#tpu.dimension_semantics<parallel>], iteration_bounds = array<i64: 2>, scalar_prefetch = 0 : i64, scratch_operands = 0 : i64, tpu.core_type = #tpu.core_type<tc>, window_params = [{transform_indices = @transform_0, window_bounds = array<i64: 8, 128>}, {pipeline_mode = #tpu.pipeline_mode<synchronous>, transform_indices = @transform_1, window_bounds = array<i64: 128, 512>}, {pipeline_mode = #tpu.pipeline_mode<synchronous>, transform_indices = @transform_2, window_bounds = array<i64: 1, 512>}, {pipeline_mode = #tpu.pipeline_mode<synchronous>, transform_indices = @transform_3, window_bounds = array<i64: 512, 128>}, {pipeline_mode = #tpu.pipeline_mode<synchronous>, transform_indices = @transform_4, window_bounds = array<i64: 1, 128>}, {transform_indices = @transform_5, window_bounds = array<i64: 8, 128>}]} {
    %c0 = arith.constant 0 : index
    %c0_0 = arith.constant 0 : index
    %0 = vector.load %arg1[%c0, %c0_0] : memref<8x128xf32, #tpu.memory_space<vmem>>, vector<8x128xf32>
    %c0_1 = arith.constant 0 : index
    %c0_2 = arith.constant 0 : index
    %1 = vector.load %arg2[%c0_1, %c0_2] : memref<128x512xf32, #tpu.memory_space<vmem>>, vector<128x512xf32>
    %cst = arith.constant dense<0.000000e+00> : vector<8x512xf32>
    %2 = tpu.matmul %0, %1, %cst {dimension_numbers = #tpu.dot_dimension_numbers<[1], [0], [0], [1], [0, 0, 1, 1], [], []>} : vector<8x128xf32>, vector<128x512xf32>, vector<8x512xf32> -> vector<8x512xf32>
    %c0_3 = arith.constant 0 : index
    %c0_4 = arith.constant 0 : index
    %3 = vector.load %arg3[%c0_3, %c0_4] : memref<1x512xf32, #tpu.memory_space<vmem>>, vector<1x512xf32>
    %4 = vector.broadcast %3 : vector<1x512xf32> to vector<8x512xf32>
    %5 = arith.addf %2, %4 : vector<8x512xf32>
    %cst_5 = arith.constant 0.000000e+00 : f32
    %6 = vector.broadcast %cst_5 : f32 to vector<8x512xf32>
    %7 = arith.maximumf %5, %6 : vector<8x512xf32>
    %c0_6 = arith.constant 0 : index
    %c0_7 = arith.constant 0 : index
    %8 = vector.load %arg4[%c0_6, %c0_7] : memref<512x128xf32, #tpu.memory_space<vmem>>, vector<512x128xf32>
    %cst_8 = arith.constant dense<0.000000e+00> : vector<8x128xf32>
    %9 = tpu.matmul %7, %8, %cst_8 {dimension_numbers = #tpu.dot_dimension_numbers<[1], [0], [0], [1], [0, 0, 1, 1], [], []>} : vector<8x512xf32>, vector<512x128xf32>, vector<8x128xf32> -> vector<8x128xf32>
    %c0_9 = arith.constant 0 : index
    %c0_10 = arith.constant 0 : index
    %10 = vector.load %arg5[%c0_9, %c0_10] : memref<1x128xf32, #tpu.memory_space<vmem>>, vector<1x128xf32>
    %11 = vector.broadcast %10 : vector<1x128xf32> to vector<8x128xf32>
    %12 = arith.addf %9, %11 : vector<8x128xf32>
    %c0_11 = arith.constant 0 : index
    %c0_12 = arith.constant 0 : index
    %13 = vector.load %arg6[%c0_11, %c0_12] : memref<8x128xf32, #tpu.memory_space<vmem>>, vector<8x128xf32>
    tpu.vector_store %arg6[%c0_11, %c0_12], %12 {strides = array<i32>} : memref<8x128xf32, #tpu.memory_space<vmem>>, vector<8x128xf32>,
    return
  }
  func.func @transform_0(%arg0: i32) -> (i32, i32) {
    %c0_i32 = arith.constant 0 : i32
    %c0_i32_0 = arith.constant 0 : i32
    return %arg0, %c0_i32 : i32, i32
  }
  func.func @transform_1(%arg0: i32) -> (i32, i32) {
    %c0_i32 = arith.constant 0 : i32
    %c0_i32_0 = arith.constant 0 : i32
    %c0_i32_1 = arith.constant 0 : i32
    return %c0_i32, %c0_i32_0 : i32, i32
  }
  func.func @transform_2(%arg0: i32) -> (i32, i32) {
    %c0_i32 = arith.constant 0 : i32
    %c0_i32_0 = arith.constant 0 : i32
    %c0_i32_1 = arith.constant 0 : i32
    return %c0_i32, %c0_i32_0 : i32, i32
  }
  func.func @transform_3(%arg0: i32) -> (i32, i32) {
    %c0_i32 = arith.constant 0 : i32
    %c0_i32_0 = arith.constant 0 : i32
    %c0_i32_1 = arith.constant 0 : i32
    return %c0_i32, %c0_i32_0 : i32, i32
  }
  func.func @transform_4(%arg0: i32) -> (i32, i32) {
    %c0_i32 = arith.constant 0 : i32
    %c0_i32_0 = arith.constant 0 : i32
    %c0_i32_1 = arith.constant 0 : i32
    return %c0_i32, %c0_i32_0 : i32, i32
  }
  func.func @transform_5(%arg0: i32) -> (i32, i32) {
    %c0_i32 = arith.constant 0 : i32
    %c0_i32_0 = arith.constant 0 : i32
    return %arg0, %c0_i32 : i32, i32
  }
}

</mosaic_0001>

<llo_original>
// kernel: feed_forward.1
$region0: #{feed_forward.1}
  #allocation0 [shape = 'u32[]', space=smem, size = 0x4, offset = 0x4, fixed_abs, tag = 'smem constant byte address 0x4 - core index']
  #allocation1 [shape = 'u32[144,128]{1,0:T(1,128)}', space=vmem, size = 0x12000, scoped, tag = 'internal scratch']
  %s0 = inlined_call_operand.vmem [shape: f32[16,128], index: 0, kind: input, shape index: {}]
  %s1 = inlined_call_operand.vmem [shape: f32[128,512], index: 1, kind: input, shape index: {}]
  %s2 = inlined_call_operand.vmem [shape: f32[1,512], index: 2, kind: input, shape index: {}]
  %s3 = inlined_call_operand.vmem [shape: f32[512,128], index: 3, kind: input, shape index: {}]
  %s4 = inlined_call_operand.vmem [shape: f32[1,128], index: 4, kind: input, shape index: {}]
  %s5 = inlined_call_operand.vmem [shape: f32[16,128], index: 5, kind: output, shape index: {}]
  %s6 = sld [smem:[#allocation0]]
  $region53: #{feed_forward.1} parent=0
    _
  %s8 = ssub.s32 1, %s6
  %s9 = scalar_select 0, %s8, %s6
  loop: start=0, step=1, limit=4
  $region2: #{feed_forward.1} parent=0 // loop_pre_header
    _
  $region3: #{feed_forward.1} parent=0 // loop_header
    %s11 = sphi 0, %s15
    %p12 = scmp.ge.s32.totalorder %s11, 4
    %s21 = sphi 0, %s23
    %s24 = sphi 0, %s21
    %s25 = sphi 0, %s24
    %s41 = sphi 0, %s25
    %s45 = sphi 0, %s45
    %s47 = sphi 0, %s45
    %s48 = sphi 0, %s47
    %s62 = sphi 0, %s48
    %s66 = sphi 0, %s66
    %s68 = sphi 0, %s66
    %s69 = sphi 0, %s68
    %s83 = sphi 0, %s69
    %s87 = sphi 0, %s87
    %s89 = sphi 0, %s87
    %s90 = sphi 0, %s89
    %s104 = sphi 0, %s90
    %s108 = sphi 0, %s108
    %s110 = sphi 0, %s108
    %s111 = sphi 0, %s110
    %s125 = sphi 0, %s111
    %s131 = sphi 0, %s133
    %s134 = sphi 0, %s131
    %s135 = sphi 0, %s134
    %s151 = sphi 0, %s135
  $region4: #{feed_forward.1} parent=0 // loop_header_branch
    %14 = sbr.rel (%p12) target = $region8
  $region5: #{feed_forward.1} parent=0 // loop_body
    %s16 = ssub.s32 %s11, 1
    %s17 = ssub.s32 %s11, 2
    %s18 = sadd.s32 %s11, 1
    %s19 = ssub.s32 %s11, %s18
    %p20 = scmp.eq.s32.totalorder %s19, 0
    %s22 = sadd.s32 %s21, 1
    %s23 = scalar_select %p20, %s21, %s22
    %p26 = pneg %p20
    %p27 = scmp.eq.s32.totalorder %s11, 1
    %p28 = por %p26, %p27
    %p29 = scmp.ne.s32.totalorder %s21, %s24
    %p30 = scmp.eq.s32.totalorder %s11, 0
    %p31 = por %p29, %p30
    %p32 = scmp.ne.s32.totalorder %s21, %s24
    %p33 = scmp.eq.s32.totalorder %s16, 1
    %p34 = por %p32, %p33
    %p35 = scmp.ne.s32.totalorder %s24, %s25
    %p36 = scmp.eq.s32.totalorder %s16, 0
    %p37 = por %p35, %p36
    %p38 = scmp.ne.s32.totalorder %s24, %s25
    %p39 = scmp.eq.s32.totalorder %s17, 1
    %p40 = por %p38, %p39
    %p42 = scmp.ne.s32.totalorder %s25, %s41
    %p43 = scmp.eq.s32.totalorder %s17, 0
    %p44 = por %p42, %p43
    %s46 = sadd.s32 %s45, 1
    %p49 = scmp.eq.s32.totalorder %s11, 1
    %p50 = scmp.ne.s32.totalorder %s45, %s47
    %p51 = scmp.eq.s32.totalorder %s11, 0
    %p52 = por %p50, %p51
    %p53 = scmp.ne.s32.totalorder %s45, %s47
    %p54 = scmp.eq.s32.totalorder %s16, 1
    %p55 = por %p53, %p54
    %p56 = scmp.ne.s32.totalorder %s47, %s48
    %p57 = scmp.eq.s32.totalorder %s16, 0
    %p58 = por %p56, %p57
    %p59 = scmp.ne.s32.totalorder %s47, %s48
    %p60 = scmp.eq.s32.totalorder %s17, 1
    %p61 = por %p59, %p60
    %p63 = scmp.ne.s32.totalorder %s48, %s62
    %p64 = scmp.eq.s32.totalorder %s17, 0
    %p65 = por %p63, %p64
    %s67 = sadd.s32 %s66, 1
    %p70 = scmp.eq.s32.totalorder %s11, 1
    %p71 = scmp.ne.s32.totalorder %s66, %s68
    %p72 = scmp.eq.s32.totalorder %s11, 0
    %p73 = por %p71, %p72
    %p74 = scmp.ne.s32.totalorder %s66, %s68
    %p75 = scmp.eq.s32.totalorder %s16, 1
    %p76 = por %p74, %p75
    %p77 = scmp.ne.s32.totalorder %s68, %s69
    %p78 = scmp.eq.s32.totalorder %s16, 0
    %p79 = por %p77, %p78
    %p80 = scmp.ne.s32.totalorder %s68, %s69
    %p81 = scmp.eq.s32.totalorder %s17, 1
    %p82 = por %p80, %p81
    %p84 = scmp.ne.s32.totalorder %s69, %s83
    %p85 = scmp.eq.s32.totalorder %s17, 0
    %p86 = por %p84, %p85
    %s88 = sadd.s32 %s87, 1
    %p91 = scmp.eq.s32.totalorder %s11, 1
    %p92 = scmp.ne.s32.totalorder %s87, %s89
    %p93 = scmp.eq.s32.totalorder %s11, 0
    %p94 = por %p92, %p93
    %p95 = scmp.ne.s32.totalorder %s87, %s89
    %p96 = scmp.eq.s32.totalorder %s16, 1
    %p97 = por %p95, %p96
    %p98 = scmp.ne.s32.totalorder %s89, %s90
    %p99 = scmp.eq.s32.totalorder %s16, 0
    %p100 = por %p98, %p99
    %p101 = scmp.ne.s32.totalorder %s89, %s90
    %p102 = scmp.eq.s32.totalorder %s17, 1
    %p103 = por %p101, %p102
    %p105 = scmp.ne.s32.totalorder %s90, %s104
    %p106 = scmp.eq.s32.totalorder %s17, 0
    %p107 = por %p105, %p106
    %s109 = sadd.s32 %s108, 1
    %p112 = scmp.eq.s32.totalorder %s11, 1
    %p113 = scmp.ne.s32.totalorder %s108, %s110
    %p114 = scmp.eq.s32.totalorder %s11, 0
    %p115 = por %p113, %p114
    %p116 = scmp.ne.s32.totalorder %s108, %s110
    %p117 = scmp.eq.s32.totalorder %s16, 1
    %p118 = por %p116, %p117
    %p119 = scmp.ne.s32.totalorder %s110, %s111
    %p120 = scmp.eq.s32.totalorder %s16, 0
    %p121 = por %p119, %p120
    %p122 = scmp.ne.s32.totalorder %s110, %s111
    %p123 = scmp.eq.s32.totalorder %s17, 1
    %p124 = por %p122, %p123
    %p126 = scmp.ne.s32.totalorder %s111, %s125
    %p127 = scmp.eq.s32.totalorder %s17, 0
    %p128 = por %p126, %p127
    %s129 = ssub.s32 %s11, %s18
    %p130 = scmp.eq.s32.totalorder %s129, 0
    %s132 = sadd.s32 %s131, 1
    %s133 = scalar_select %p130, %s131, %s132
    %p136 = pneg %p130
    %p137 = scmp.eq.s32.totalorder %s11, 1
    %p138 = por %p136, %p137
    %p139 = scmp.ne.s32.totalorder %s131, %s134
    %p140 = scmp.eq.s32.totalorder %s11, 0
    %p141 = por %p139, %p140
    %p142 = scmp.ne.s32.totalorder %s131, %s134
    %p143 = scmp.eq.s32.totalorder %s16, 1
    %p144 = por %p142, %p143
    %p145 = scmp.ne.s32.totalorder %s134, %s135
    %p146 = scmp.eq.s32.totalorder %s16, 0
    %p147 = por %p145, %p146
    %p148 = scmp.ne.s32.totalorder %s134, %s135
    %p149 = scmp.eq.s32.totalorder %s17, 1
    %p150 = por %p148, %p149
    %p152 = scmp.ne.s32.totalorder %s135, %s151
    %p153 = scmp.eq.s32.totalorder %s17, 0
    %p154 = por %p152, %p153
    %p155 = scmp.le.s32.totalorder 1, %s11
    %p156 = scmp.lt.s32.totalorder %s11, 3
    %p157 = pnand %p155, %p156
    %p158 = pneg %p157
    // Predicated region
    $region9: #{feed_forward.1} parent=5 // pred_check
      _
    $region10: #{feed_forward.1} parent=5 // pred_check_branch
      %160 = sbr.rel (%p157) target = $region12
    $region11: #{feed_forward.1} parent=5 // pred_region
      %s161 = ssub.s32 %s11, 1
      // Predicated region
      $region13: #{feed_forward.1} parent=11 // pred_check
        %p162 = pneg %p58
      $region14: #{feed_forward.1} parent=11 // pred_check_branch
        %164 = sbr.rel (%p162) target = $region16
      $region15: #{feed_forward.1} parent=11 // pred_region
        _
      $region16: #{feed_forward.1} parent=11 // pred_fallthru
        _
      // Predicated region
      $region17: #{feed_forward.1} parent=11 // pred_check
        %p165 = pneg %p79
      $region18: #{feed_forward.1} parent=11 // pred_check_branch
        %167 = sbr.rel (%p165) target = $region20
      $region19: #{feed_forward.1} parent=11 // pred_region
        _
      $region20: #{feed_forward.1} parent=11 // pred_fallthru
        _
      // Predicated region
      $region21: #{feed_forward.1} parent=11 // pred_check
        %p168 = pneg %p100
      $region22: #{feed_forward.1} parent=11 // pred_check_branch
        %170 = sbr.rel (%p168) target = $region24
      $region23: #{feed_forward.1} parent=11 // pred_region
        _
      $region24: #{feed_forward.1} parent=11 // pred_fallthru
        _
      // Predicated region
      $region25: #{feed_forward.1} parent=11 // pred_check
        %p171 = pneg %p121
      $region26: #{feed_forward.1} parent=11 // pred_check_branch
        %173 = sbr.rel (%p171) target = $region28
      $region27: #{feed_forward.1} parent=11 // pred_region
        _
      $region28: #{feed_forward.1} parent=11 // pred_fallthru
        _
    $region12: #{feed_forward.1} parent=5 // pred_fallthru
      _
    %p174 = scmp.lt.s32.totalorder %s11, 2
    // Predicated region
    $region29: #{feed_forward.1} parent=5 // pred_check
      %p175 = pneg %p174
    $region30: #{feed_forward.1} parent=5 // pred_check_branch
      %177 = sbr.rel (%p175) target = $region32
    $region31: #{feed_forward.1} parent=5 // pred_region
      // Predicated region
      $region33: #{feed_forward.1} parent=31 // pred_check
        %p178 = pneg %p31
      $region34: #{feed_forward.1} parent=31 // pred_check_branch
        %180 = sbr.rel (%p178) target = $region36
      $region35: #{feed_forward.1} parent=31 // pred_region
        %p181 = scmp.lt.s32.totalorder %s11, 1
        %s182 = scalar_select %p181, %s11, 1
        %s183 = smul.addr %s182, 8
        %s184 = scalar_lea.vmem %s0, %s183
      $region36: #{feed_forward.1} parent=31 // pred_fallthru
        _
    $region32: #{feed_forward.1} parent=5 // pred_fallthru
      _
    %p185 = scmp.le.s32.totalorder 1, %s11
    %p186 = scmp.lt.s32.totalorder %s11, 3
    %p187 = pnand %p185, %p186
    %p188 = pneg %p187
    // Predicated region
    $region37: #{feed_forward.1} parent=5 // pred_check
      _
    $region38: #{feed_forward.1} parent=5 // pred_check_branch
      %190 = sbr.rel (%p187) target = $region40
    $region39: #{feed_forward.1} parent=5 // pred_region
      %s191 = ssub.s32 %s11, 1
      %p192 = scmp.lt.s32.totalorder %s16, 1
      %s193 = scalar_select %p192, %s16, 1
      %s194 = smul.addr %s193, 8
      %s195 = scalar_lea.vmem %s0, %s194
      %p196 = pneg %p37
      %p197 = pneg %p34
      %p198 = pneg %p58
      %p199 = pneg %p55
      %p200 = pneg %p79
      %p201 = pneg %p76
      %p202 = pneg %p100
      %p203 = pneg %p97
      %p204 = pneg %p121
      %p205 = pneg %p118
      %p206 = pneg %p147
      %p207 = pneg %p144
      %p208 = scmp.lt.s32.totalorder %s16, 1
      %s209 = scalar_select %p208, %s16, 1
      %s210 = smul.addr %s209, 8
      %s211 = scalar_lea.vmem %s5, %s210
      %p212 = scmp.lt.s32.totalorder %s16, 1
      %s213 = scalar_select %p212, %s16, 1
      %s214 = smul.addr %s213, 8
      %s215 = scalar_lea.vmem %s0, %s214
      %p216 = scmp.lt.s32.totalorder %s16, 1
      %s217 = scalar_select %p216, %s16, 1
      %s218 = smul.addr %s217, 8
      %s219 = scalar_lea.vmem %s5, %s218
      %v220 = vld [vmem:[%s215] sm:$0xff]
      %v221 = vld [vmem:[%s1] sm:$0xff]
      %v222 = vld [vmem:[%s1 + $0x8] sm:$0xff]
      %v223 = vld [vmem:[%s1 + $0x10] sm:$0xff]
      %v224 = vld [vmem:[%s1 + $0x18] sm:$0xff]
      %v225 = vld [vmem:[%s1 + $0x20] sm:$0xff]
      %v226 = vld [vmem:[%s1 + $0x28] sm:$0xff]
      %v227 = vld [vmem:[%s1 + $0x30] sm:$0xff]
      %v228 = vld [vmem:[%s1 + $0x38] sm:$0xff]
      %v229 = vld [vmem:[%s1 + $0x40] sm:$0xff]
      %v230 = vld [vmem:[%s1 + $0x48] sm:$0xff]
      %v231 = vld [vmem:[%s1 + $0x50] sm:$0xff]
      %v232 = vld [vmem:[%s1 + $0x58] sm:$0xff]
      %v233 = vld [vmem:[%s1 + $0x60] sm:$0xff]
      %v234 = vld [vmem:[%s1 + $0x68] sm:$0xff]
      %v235 = vld [vmem:[%s1 + $0x70] sm:$0xff]
      %v236 = vld [vmem:[%s1 + $0x78] sm:$0xff]
      %v237 = vld [vmem:[%s1 + $0x80] sm:$0xff]
      %v238 = vld [vmem:[%s1 + $0x88] sm:$0xff]
      %v239 = vld [vmem:[%s1 + $0x90] sm:$0xff]
      %v240 = vld [vmem:[%s1 + $0x98] sm:$0xff]
      %v241 = vld [vmem:[%s1 + $0xa0] sm:$0xff]
      %v242 = vld [vmem:[%s1 + $0xa8] sm:$0xff]
      %v243 = vld [vmem:[%s1 + $0xb0] sm:$0xff]
      %v244 = vld [vmem:[%s1 + $0xb8] sm:$0xff]
      %v245 = vld [vmem:[%s1 + $0xc0] sm:$0xff]
      %v246 = vld [vmem:[%s1 + $0xc8] sm:$0xff]
      %v247 = vld [vmem:[%s1 + $0xd0] sm:$0xff]
      %v248 = vld [vmem:[%s1 + $0xd8] sm:$0xff]
      %v249 = vld [vmem:[%s1 + $0xe0] sm:$0xff]
      %v250 = vld [vmem:[%s1 + $0xe8] sm:$0xff]
      %v251 = vld [vmem:[%s1 + $0xf0] sm:$0xff]
      %v252 = vld [vmem:[%s1 + $0xf8] sm:$0xff]
      %v253 = vld [vmem:[%s1 + $0x100] sm:$0xff]
      %v254 = vld [vmem:[%s1 + $0x108] sm:$0xff]
      %v255 = vld [vmem:[%s1 + $0x110] sm:$0xff]
      %v256 = vld [vmem:[%s1 + $0x118] sm:$0xff]
      %v257 = vld [vmem:[%s1 + $0x120] sm:$0xff]
      %v258 = vld [vmem:[%s1 + $0x128] sm:$0xff]
      %v259 = vld [vmem:[%s1 + $0x130] sm:$0xff]
      %v260 = vld [vmem:[%s1 + $0x138] sm:$0xff]
      %v261 = vld [vmem:[%s1 + $0x140] sm:$0xff]
      %v262 = vld [vmem:[%s1 + $0x148] sm:$0xff]
      %v263 = vld [vmem:[%s1 + $0x150] sm:$0xff]
      %v264 = vld [vmem:[%s1 + $0x158] sm:$0xff]
      %v265 = vld [vmem:[%s1 + $0x160] sm:$0xff]
      %v266 = vld [vmem:[%s1 + $0x168] sm:$0xff]
      %v267 = vld [vmem:[%s1 + $0x170] sm:$0xff]
      %v268 = vld [vmem:[%s1 + $0x178] sm:$0xff]
      %v269 = vld [vmem:[%s1 + $0x180] sm:$0xff]
      %v270 = vld [vmem:[%s1 + $0x188] sm:$0xff]
      %v271 = vld [vmem:[%s1 + $0x190] sm:$0xff]
      %v272 = vld [vmem:[%s1 + $0x198] sm:$0xff]
      %v273 = vld [vmem:[%s1 + $0x1a0] sm:$0xff]
      %v274 = vld [vmem:[%s1 + $0x1a8] sm:$0xff]
      %v275 = vld [vmem:[%s1 + $0x1b0] sm:$0xff]
      %v276 = vld [vmem:[%s1 + $0x1b8] sm:$0xff]
      %v277 = vld [vmem:[%s1 + $0x1c0] sm:$0xff]
      %v278 = vld [vmem:[%s1 + $0x1c8] sm:$0xff]
      %v279 = vld [vmem:[%s1 + $0x1d0] sm:$0xff]
      %v280 = vld [vmem:[%s1 + $0x1d8] sm:$0xff]
      %v281 = vld [vmem:[%s1 + $0x1e0] sm:$0xff]
      %v282 = vld [vmem:[%s1 + $0x1e8] sm:$0xff]
      %v283 = vld [vmem:[%s1 + $0x1f0] sm:$0xff]
      %v284 = vld [vmem:[%s1 + $0x1f8] sm:$0xff]
      %v285 = vld [vmem:[%s2] sm:$0xf]
      %v287 = vlaneseq
      %v288 = vshrl.u32 %v287, 7
      %v289 = vsub.s32 0, %v288
      %v290 = vrot.slane %v285, %v289
      %v291 = vlaneseq
      %v292 = vshrl.u32 %v291, 7
      %v293 = vsub.s32 1, %v292
      %v294 = vrot.slane %v285, %v293
      %v295 = vlaneseq
      %v296 = vshrl.u32 %v295, 7
      %v297 = vsub.s32 2, %v296
      %v298 = vrot.slane %v285, %v297
      %v299 = vlaneseq
      %v300 = vshrl.u32 %v299, 7
      %v301 = vsub.s32 3, %v300
      %v302 = vrot.slane %v285, %v301
      %307 = vmatprep.subr.mxu0 %v222
      %308 = vmatpush1.msra.mxu0 %v221
      %309 = vmatprep.subr.mxu0 %v226
      %310 = vmatpush1.msra.mxu0 %v225
      %311 = vmatprep.subr.mxu0 %v230
      %312 = vmatpush1.msra.mxu0 %v229
      %313 = vmatprep.subr.mxu0 %v234
      %314 = vmatpush1.msra.mxu0 %v233
      %315 = vmatprep.subr.mxu0 %v238
      %316 = vmatpush1.msra.mxu0 %v237
      %317 = vmatprep.subr.mxu0 %v242
      %318 = vmatpush1.msra.mxu0 %v241
      %319 = vmatprep.subr.mxu0 %v246
      %320 = vmatpush1.msra.mxu0 %v245
      %321 = vmatprep.subr.mxu0 %v250
      %322 = vmatpush1.msra.mxu0 %v249
      %323 = vmatprep.subr.mxu0 %v254
      %324 = vmatpush1.msra.mxu0 %v253
      %325 = vmatprep.subr.mxu0 %v258
      %326 = vmatpush1.msra.mxu0 %v257
      %327 = vmatprep.subr.mxu0 %v262
      %328 = vmatpush1.msra.mxu0 %v261
      %329 = vmatprep.subr.mxu0 %v266
      %330 = vmatpush1.msra.mxu0 %v265
      %331 = vmatprep.subr.mxu0 %v270
      %332 = vmatpush1.msra.mxu0 %v269
      %333 = vmatprep.subr.mxu0 %v274
      %334 = vmatpush1.msra.mxu0 %v273
      %335 = vmatprep.subr.mxu0 %v278
      %336 = vmatpush1.msra.mxu0 %v277
      %337 = vmatprep.subr.mxu0 %v282
      %338 = vmatpush1.msra.mxu0 %v281
      %339 = vmatprep.subr.mxu0 0.0
      %340 = vmatpush1.msra.mxu0 0.0
      %341 = vmatprep.subr.mxu0 0.0
      %342 = vmatpush1.msra.mxu0 0.0
      %343 = vmatprep.subr.mxu0 0.0
      %344 = vmatpush1.msra.mxu0 0.0
      %345 = vmatprep.subr.mxu0 0.0
      %346 = vmatpush1.msra.mxu0 0.0
      %347 = vmatprep.subr.mxu0 0.0
      %348 = vmatpush1.msra.mxu0 0.0
      %349 = vmatprep.subr.mxu0 0.0
      %350 = vmatpush1.msra.mxu0 0.0
      %351 = vmatprep.subr.mxu0 0.0
      %352 = vmatpush1.msra.mxu0 0.0
      %353 = vmatprep.subr.mxu0 0.0
      %354 = vmatpush1.msra.mxu0 0.0
      %355 = vmatprep.subr.mxu0 0.0
      %356 = vmatpush1.msra.mxu0 0.0
      %357 = vmatprep.subr.mxu0 0.0
      %358 = vmatpush1.msra.mxu0 0.0
      %359 = vmatprep.subr.mxu0 0.0
      %360 = vmatpush1.msra.mxu0 0.0
      %361 = vmatprep.subr.mxu0 0.0
      %362 = vmatpush1.msra.mxu0 0.0
      %363 = vmatprep.subr.mxu0 0.0
      %364 = vmatpush1.msra.mxu0 0.0
      %365 = vmatprep.subr.mxu0 0.0
      %366 = vmatpush1.msra.mxu0 0.0
      %367 = vmatprep.subr.mxu0 0.0
      %368 = vmatpush1.msra.mxu0 0.0
      %369 = vmatprep.subr.mxu0 0.0
      %370 = vmatpush1.msra.mxu0 0.0
      %371 = vmatprep.mubr.f32.mxu0 0.0
      %372 = vmatmul.mubr.f32.gmra.mrb[0].mxu0 %v220
      %v373 = vpop.f32.mrb[0].mxu0
      %v374 = vadd.f32 %v290, %v373
      %v375 = vpop.f32.mrb[0].mxu0
      %v376 = vadd.f32 %v294, %v375
      %377 = vdwg.mxu0
      %378 = vmatprep.subr.mxu0 %v224
      %379 = vmatpush1.msra.mxu0 %v223
      %380 = vmatprep.subr.mxu0 %v228
      %381 = vmatpush1.msra.mxu0 %v227
      %382 = vmatprep.subr.mxu0 %v232
      %383 = vmatpush1.msra.mxu0 %v231
      %384 = vmatprep.subr.mxu0 %v236
      %385 = vmatpush1.msra.mxu0 %v235
      %386 = vmatprep.subr.mxu0 %v240
      %387 = vmatpush1.msra.mxu0 %v239
      %388 = vmatprep.subr.mxu0 %v244
      %389 = vmatpush1.msra.mxu0 %v243
      %390 = vmatprep.subr.mxu0 %v248
      %391 = vmatpush1.msra.mxu0 %v247
      %392 = vmatprep.subr.mxu0 %v252
      %393 = vmatpush1.msra.mxu0 %v251
      %394 = vmatprep.subr.mxu0 %v256
      %395 = vmatpush1.msra.mxu0 %v255
      %396 = vmatprep.subr.mxu0 %v260
      %397 = vmatpush1.msra.mxu0 %v259
      %398 = vmatprep.subr.mxu0 %v264
      %399 = vmatpush1.msra.mxu0 %v263
      %400 = vmatprep.subr.mxu0 %v268
      %401 = vmatpush1.msra.mxu0 %v267
      %402 = vmatprep.subr.mxu0 %v272
      %403 = vmatpush1.msra.mxu0 %v271
      %404 = vmatprep.subr.mxu0 %v276
      %405 = vmatpush1.msra.mxu0 %v275
      %406 = vmatprep.subr.mxu0 %v280
      %407 = vmatpush1.msra.mxu0 %v279
      %408 = vmatprep.subr.mxu0 %v284
      %409 = vmatpush1.msra.mxu0 %v283
      %410 = vmatprep.subr.mxu0 0.0
      %411 = vmatpush1.msra.mxu0 0.0
      %412 = vmatprep.subr.mxu0 0.0
      %413 = vmatpush1.msra.mxu0 0.0
      %414 = vmatprep.subr.mxu0 0.0
      %415 = vmatpush1.msra.mxu0 0.0
      %416 = vmatprep.subr.mxu0 0.0
      %417 = vmatpush1.msra.mxu0 0.0
      %418 = vmatprep.subr.mxu0 0.0
      %419 = vmatpush1.msra.mxu0 0.0
      %420 = vmatprep.subr.mxu0 0.0
      %421 = vmatpush1.msra.mxu0 0.0
      %422 = vmatprep.subr.mxu0 0.0
      %423 = vmatpush1.msra.mxu0 0.0
      %424 = vmatprep.subr.mxu0 0.0
      %425 = vmatpush1.msra.mxu0 0.0
      %426 = vmatprep.subr.mxu0 0.0
      %427 = vmatpush1.msra.mxu0 0.0
      %428 = vmatprep.subr.mxu0 0.0
      %429 = vmatpush1.msra.mxu0 0.0
      %430 = vmatprep.subr.mxu0 0.0
      %431 = vmatpush1.msra.mxu0 0.0
      %432 = vmatprep.subr.mxu0 0.0
      %433 = vmatpush1.msra.mxu0 0.0
      %434 = vmatprep.subr.mxu0 0.0
      %435 = vmatpush1.msra.mxu0 0.0
      %436 = vmatprep.subr.mxu0 0.0
      %437 = vmatpush1.msra.mxu0 0.0
      %438 = vmatprep.subr.mxu0 0.0
      %439 = vmatpush1.msra.mxu0 0.0
      %440 = vmatprep.subr.mxu0 0.0
      %441 = vmatpush1.msra.mxu0 0.0
      %442 = vmatprep.mubr.f32.mxu0 0.0
      %443 = vmatmul.mubr.f32.gmra.mrb[0].mxu0 %v220
      %v444 = vpop.f32.mrb[0].mxu0
      %v445 = vadd.f32 %v298, %v444
      %v446 = vpop.f32.mrb[0].mxu0
      %v447 = vadd.f32 %v302, %v446
      %448 = vdwg.mxu0
      %v449 = vmax.f32 %v374, 0.0
      %v450 = vmax.f32 %v376, 0.0
      %v451 = vmax.f32 %v445, 0.0
      %v452 = vmax.f32 %v447, 0.0
      %v453 = vld [vmem:[%s3] sm:$0xff]
      %v454 = vld [vmem:[%s3 + $0x8] sm:$0xff]
      %v455 = vld [vmem:[%s3 + $0x10] sm:$0xff]
      %v456 = vld [vmem:[%s3 + $0x18] sm:$0xff]
      %v457 = vld [vmem:[%s3 + $0x20] sm:$0xff]
      %v458 = vld [vmem:[%s3 + $0x28] sm:$0xff]
      %v459 = vld [vmem:[%s3 + $0x30] sm:$0xff]
      %v460 = vld [vmem:[%s3 + $0x38] sm:$0xff]
      %v461 = vld [vmem:[%s3 + $0x40] sm:$0xff]
      %v462 = vld [vmem:[%s3 + $0x48] sm:$0xff]
      %v463 = vld [vmem:[%s3 + $0x50] sm:$0xff]
      %v464 = vld [vmem:[%s3 + $0x58] sm:$0xff]
      %v465 = vld [vmem:[%s3 + $0x60] sm:$0xff]
      %v466 = vld [vmem:[%s3 + $0x68] sm:$0xff]
      %v467 = vld [vmem:[%s3 + $0x70] sm:$0xff]
      %v468 = vld [vmem:[%s3 + $0x78] sm:$0xff]
      %v469 = vld [vmem:[%s3 + $0x80] sm:$0xff]
      %v470 = vld [vmem:[%s3 + $0x88] sm:$0xff]
      %v471 = vld [vmem:[%s3 + $0x90] sm:$0xff]
      %v472 = vld [vmem:[%s3 + $0x98] sm:$0xff]
      %v473 = vld [vmem:[%s3 + $0xa0] sm:$0xff]
      %v474 = vld [vmem:[%s3 + $0xa8] sm:$0xff]
      %v475 = vld [vmem:[%s3 + $0xb0] sm:$0xff]
      %v476 = vld [vmem:[%s3 + $0xb8] sm:$0xff]
      %v477 = vld [vmem:[%s3 + $0xc0] sm:$0xff]
      %v478 = vld [vmem:[%s3 + $0xc8] sm:$0xff]
      %v479 = vld [vmem:[%s3 + $0xd0] sm:$0xff]
      %v480 = vld [vmem:[%s3 + $0xd8] sm:$0xff]
      %v481 = vld [vmem:[%s3 + $0xe0] sm:$0xff]
      %v482 = vld [vmem:[%s3 + $0xe8] sm:$0xff]
      %v483 = vld [vmem:[%s3 + $0xf0] sm:$0xff]
      %v484 = vld [vmem:[%s3 + $0xf8] sm:$0xff]
      %v485 = vld [vmem:[%s3 + $0x100] sm:$0xff]
      %v486 = vld [vmem:[%s3 + $0x108] sm:$0xff]
      %v487 = vld [vmem:[%s3 + $0x110] sm:$0xff]
      %v488 = vld [vmem:[%s3 + $0x118] sm:$0xff]
      %v489 = vld [vmem:[%s3 + $0x120] sm:$0xff]
      %v490 = vld [vmem:[%s3 + $0x128] sm:$0xff]
      %v491 = vld [vmem:[%s3 + $0x130] sm:$0xff]
      %v492 = vld [vmem:[%s3 + $0x138] sm:$0xff]
      %v493 = vld [vmem:[%s3 + $0x140] sm:$0xff]
      %v494 = vld [vmem:[%s3 + $0x148] sm:$0xff]
      %v495 = vld [vmem:[%s3 + $0x150] sm:$0xff]
      %v496 = vld [vmem:[%s3 + $0x158] sm:$0xff]
      %v497 = vld [vmem:[%s3 + $0x160] sm:$0xff]
      %v498 = vld [vmem:[%s3 + $0x168] sm:$0xff]
      %v499 = vld [vmem:[%s3 + $0x170] sm:$0xff]
      %v500 = vld [vmem:[%s3 + $0x178] sm:$0xff]
      %v501 = vld [vmem:[%s3 + $0x180] sm:$0xff]
      %v502 = vld [vmem:[%s3 + $0x188] sm:$0xff]
      %v503 = vld [vmem:[%s3 + $0x190] sm:$0xff]
      %v504 = vld [vmem:[%s3 + $0x198] sm:$0xff]
      %v505 = vld [vmem:[%s3 + $0x1a0] sm:$0xff]
      %v506 = vld [vmem:[%s3 + $0x1a8] sm:$0xff]
      %v507 = vld [vmem:[%s3 + $0x1b0] sm:$0xff]
      %v508 = vld [vmem:[%s3 + $0x1b8] sm:$0xff]
      %v509 = vld [vmem:[%s3 + $0x1c0] sm:$0xff]
      %v510 = vld [vmem:[%s3 + $0x1c8] sm:$0xff]
      %v511 = vld [vmem:[%s3 + $0x1d0] sm:$0xff]
      %v512 = vld [vmem:[%s3 + $0x1d8] sm:$0xff]
      %v513 = vld [vmem:[%s3 + $0x1e0] sm:$0xff]
      %v514 = vld [vmem:[%s3 + $0x1e8] sm:$0xff]
      %v515 = vld [vmem:[%s3 + $0x1f0] sm:$0xff]
      %v516 = vld [vmem:[%s3 + $0x1f8] sm:$0xff]
      %v517 = vld [vmem:[%s4] sm:$0x1]
      %v519 = vlaneseq
      %v520 = vshrl.u32 %v519, 7
      %v521 = vsub.s32 0, %v520
      %v522 = vrot.slane %v517, %v521
      %524 = vmatprep.subr.mxu0 0.0
      %525 = vmatpush1.msra.mxu0 %v453
      %526 = vmatprep.subr.mxu0 0.0
      %527 = vmatpush1.msra.mxu0 %v454
      %528 = vmatprep.subr.mxu0 0.0
      %529 = vmatpush1.msra.mxu0 %v455
      %530 = vmatprep.subr.mxu0 0.0
      %531 = vmatpush1.msra.mxu0 %v456
      %532 = vmatprep.subr.mxu0 0.0
      %533 = vmatpush1.msra.mxu0 %v457
      %534 = vmatprep.subr.mxu0 0.0
      %535 = vmatpush1.msra.mxu0 %v458
      %536 = vmatprep.subr.mxu0 0.0
      %537 = vmatpush1.msra.mxu0 %v459
      %538 = vmatprep.subr.mxu0 0.0
      %539 = vmatpush1.msra.mxu0 %v460
      %540 = vmatprep.subr.mxu0 0.0
      %541 = vmatpush1.msra.mxu0 %v461
      %542 = vmatprep.subr.mxu0 0.0
      %543 = vmatpush1.msra.mxu0 %v462
      %544 = vmatprep.subr.mxu0 0.0
      %545 = vmatpush1.msra.mxu0 %v463
      %546 = vmatprep.subr.mxu0 0.0
      %547 = vmatpush1.msra.mxu0 %v464
      %548 = vmatprep.subr.mxu0 0.0
      %549 = vmatpush1.msra.mxu0 %v465
      %550 = vmatprep.subr.mxu0 0.0
      %551 = vmatpush1.msra.mxu0 %v466
      %552 = vmatprep.subr.mxu0 0.0
      %553 = vmatpush1.msra.mxu0 %v467
      %554 = vmatprep.subr.mxu0 0.0
      %555 = vmatpush1.msra.mxu0 %v468
      %556 = vmatprep.subr.mxu0 0.0
      %557 = vmatpush1.msra.mxu0 %v469
      %558 = vmatprep.subr.mxu0 0.0
      %559 = vmatpush1.msra.mxu0 %v470
      %560 = vmatprep.subr.mxu0 0.0
      %561 = vmatpush1.msra.mxu0 %v471
      %562 = vmatprep.subr.mxu0 0.0
      %563 = vmatpush1.msra.mxu0 %v472
      %564 = vmatprep.subr.mxu0 0.0
      %565 = vmatpush1.msra.mxu0 %v473
      %566 = vmatprep.subr.mxu0 0.0
      %567 = vmatpush1.msra.mxu0 %v474
      %568 = vmatprep.subr.mxu0 0.0
      %569 = vmatpush1.msra.mxu0 %v475
      %570 = vmatprep.subr.mxu0 0.0
      %571 = vmatpush1.msra.mxu0 %v476
      %572 = vmatprep.subr.mxu0 0.0
      %573 = vmatpush1.msra.mxu0 %v477
      %574 = vmatprep.subr.mxu0 0.0
      %575 = vmatpush1.msra.mxu0 %v478
      %576 = vmatprep.subr.mxu0 0.0
      %577 = vmatpush1.msra.mxu0 %v479
      %578 = vmatprep.subr.mxu0 0.0
      %579 = vmatpush1.msra.mxu0 %v480
      %580 = vmatprep.subr.mxu0 0.0
      %581 = vmatpush1.msra.mxu0 %v481
      %582 = vmatprep.subr.mxu0 0.0
      %583 = vmatpush1.msra.mxu0 %v482
      %584 = vmatprep.subr.mxu0 0.0
      %585 = vmatpush1.msra.mxu0 %v483
      %586 = vmatprep.subr.mxu0 0.0
      %587 = vmatpush1.msra.mxu0 %v484
      %588 = vmatprep.mubr.f32.mxu0 %v450
      %589 = vmatmul.mubr.f32.gmra.mrb[0].mxu0 %v449
      %v590 = vpop.f32.mrb[0].mxu0
      %v591 = vadd.f32 %v522, %v590
      %v592 = vpop.f32.mrb[0].mxu0
      %593 = vdwg.mxu0
      %594 = vmatprep.subr.mxu0 0.0
      %595 = vmatpush1.msra.mxu0 %v485
      %596 = vmatprep.subr.mxu0 0.0
      %597 = vmatpush1.msra.mxu0 %v486
      %598 = vmatprep.subr.mxu0 0.0
      %599 = vmatpush1.msra.mxu0 %v487
      %600 = vmatprep.subr.mxu0 0.0
      %601 = vmatpush1.msra.mxu0 %v488
      %602 = vmatprep.subr.mxu0 0.0
      %603 = vmatpush1.msra.mxu0 %v489
      %604 = vmatprep.subr.mxu0 0.0
      %605 = vmatpush1.msra.mxu0 %v490
      %606 = vmatprep.subr.mxu0 0.0
      %607 = vmatpush1.msra.mxu0 %v491
      %608 = vmatprep.subr.mxu0 0.0
      %609 = vmatpush1.msra.mxu0 %v492
      %610 = vmatprep.subr.mxu0 0.0
      %611 = vmatpush1.msra.mxu0 %v493
      %612 = vmatprep.subr.mxu0 0.0
      %613 = vmatpush1.msra.mxu0 %v494
      %614 = vmatprep.subr.mxu0 0.0
      %615 = vmatpush1.msra.mxu0 %v495
      %616 = vmatprep.subr.mxu0 0.0
      %617 = vmatpush1.msra.mxu0 %v496
      %618 = vmatprep.subr.mxu0 0.0
      %619 = vmatpush1.msra.mxu0 %v497
      %620 = vmatprep.subr.mxu0 0.0
      %621 = vmatpush1.msra.mxu0 %v498
      %622 = vmatprep.subr.mxu0 0.0
      %623 = vmatpush1.msra.mxu0 %v499
      %624 = vmatprep.subr.mxu0 0.0
      %625 = vmatpush1.msra.mxu0 %v500
      %626 = vmatprep.subr.mxu0 0.0
      %627 = vmatpush1.msra.mxu0 %v501
      %628 = vmatprep.subr.mxu0 0.0
      %629 = vmatpush1.msra.mxu0 %v502
      %630 = vmatprep.subr.mxu0 0.0
      %631 = vmatpush1.msra.mxu0 %v503
      %632 = vmatprep.subr.mxu0 0.0
      %633 = vmatpush1.msra.mxu0 %v504
      %634 = vmatprep.subr.mxu0 0.0
      %635 = vmatpush1.msra.mxu0 %v505
      %636 = vmatprep.subr.mxu0 0.0
      %637 = vmatpush1.msra.mxu0 %v506
      %638 = vmatprep.subr.mxu0 0.0
      %639 = vmatpush1.msra.mxu0 %v507
      %640 = vmatprep.subr.mxu0 0.0
      %641 = vmatpush1.msra.mxu0 %v508
      %642 = vmatprep.subr.mxu0 0.0
      %643 = vmatpush1.msra.mxu0 %v509
      %644 = vmatprep.subr.mxu0 0.0
      %645 = vmatpush1.msra.mxu0 %v510
      %646 = vmatprep.subr.mxu0 0.0
      %647 = vmatpush1.msra.mxu0 %v511
      %648 = vmatprep.subr.mxu0 0.0
      %649 = vmatpush1.msra.mxu0 %v512
      %650 = vmatprep.subr.mxu0 0.0
      %651 = vmatpush1.msra.mxu0 %v513
      %652 = vmatprep.subr.mxu0 0.0
      %653 = vmatpush1.msra.mxu0 %v514
      %654 = vmatprep.subr.mxu0 0.0
      %655 = vmatpush1.msra.mxu0 %v515
      %656 = vmatprep.subr.mxu0 0.0
      %657 = vmatpush1.msra.mxu0 %v516
      %658 = vmatprep.mubr.f32.mxu0 %v452
      %659 = vmatmul.mubr.f32.gmra.mrb[0].mxu0 %v451
      %v660 = vpop.f32.mrb[0].mxu0
      %v661 = vadd.f32 %v591, %v660
      %v662 = vpop.f32.mrb[0].mxu0
      %663 = vdwg.mxu0
      %664 = vst [vmem:[%s219] sm:$0xff] %v661
      %p665 = scmp.lt.s32.totalorder %s16, 1
      %s666 = scalar_select %p665, %s16, 1
      %s667 = smul.addr %s666, 8
      %s668 = scalar_lea.vmem %s5, %s667
      // Predicated region
      $region41: #{feed_forward.1} parent=39 // pred_check
        %p669 = pneg %p144
      $region42: #{feed_forward.1} parent=39 // pred_check_branch
        %671 = sbr.rel (%p669) target = $region44
      $region43: #{feed_forward.1} parent=39 // pred_region
        _
      $region44: #{feed_forward.1} parent=39 // pred_fallthru
        _
    $region40: #{feed_forward.1} parent=5 // pred_fallthru
      _
    %p672 = scmp.le.s32.totalorder 2, %s11
    // Predicated region
    $region45: #{feed_forward.1} parent=5 // pred_check
      %p673 = pneg %p672
    $region46: #{feed_forward.1} parent=5 // pred_check_branch
      %675 = sbr.rel (%p673) target = $region48
    $region47: #{feed_forward.1} parent=5 // pred_region
      %s676 = ssub.s32 %s11, 2
      // Predicated region
      $region49: #{feed_forward.1} parent=47 // pred_check
        %p677 = pneg %p150
      $region50: #{feed_forward.1} parent=47 // pred_check_branch
        %679 = sbr.rel (%p677) target = $region52
      $region51: #{feed_forward.1} parent=47 // pred_region
        %p680 = scmp.lt.s32.totalorder %s17, 1
        %s681 = scalar_select %p680, %s17, 1
        %s682 = smul.addr %s681, 8
        %s683 = scalar_lea.vmem %s5, %s682
      $region52: #{feed_forward.1} parent=47 // pred_fallthru
        _
    $region48: #{feed_forward.1} parent=5 // pred_fallthru
      _
  $region6: #{feed_forward.1} parent=0 // loop_footer
    %s15 = sadd.s32 1, %s11
  $region7: #{feed_forward.1} parent=0 // loop_footer_branch
    %10 = sbr.rel target = $region3
  $region8: #{feed_forward.1} parent=0 // loop_exit
    _

</llo_original>
